<compile_context>
chip_gen: v7x
topology: tpu7x:2x2x1
jax: 0.10.0
libtpu: 0.0.40
codegen_flags: <defaults>
</compile_context>

<pallas_src>
import jax
import jax.numpy as jnp
from jax.experimental import pallas as pl
from jax.experimental.pallas import tpu as pltpu


def _round_up(n, m):
    return ((n + m - 1) // m) * m


def gating_mlp_kernel(x_ref, w1_ref, b1_ref, w2_ref, b2_ref, w3_ref, b3_ref,
                      o_ref):
    """One batch tile of the fused 3-layer gating MLP (eval mode)."""
    x = x_ref[...]                                            # [TB, D] bf16

    h1 = jnp.dot(x, w1_ref[...], preferred_element_type=jnp.float32)
    h1 = jnp.maximum(h1 + b1_ref[...], 0.0)                   # ReLU on f32 acc
    h1 = h1.astype(x.dtype)                                   # bf16 for next MXU pass

    h2 = jnp.dot(h1, w2_ref[...], preferred_element_type=jnp.float32)
    h2 = jnp.maximum(h2 + b2_ref[...], 0.0)
    h2 = h2.astype(x.dtype)

    out = jnp.dot(h2, w3_ref[...], preferred_element_type=jnp.float32)
    o_ref[...] = (out + b3_ref[...]).astype(o_ref.dtype)


def gating_network_forward(x, params, *, batch_tile=512):
    """Fused gating MLP.

    x:      [B, input_dim] float32
    params: dict with w1 [D, H1], b1 [1, H1], w2 [H1, H2], b2 [1, H2],
            w3 [H2, E], b3 [1, E]  (weights transposed vs. PyTorch)
    returns [B, E] float32 logits.
    """
    B, D = x.shape
    H1 = params["w1"].shape[1]
    H2 = params["w2"].shape[1]
    E = params["w3"].shape[1]

    # bf16 halves HBM traffic for the operands that matter (x dominates).
    x_bf = x.astype(jnp.bfloat16)
    w1 = params["w1"].astype(jnp.bfloat16)
    w2 = params["w2"].astype(jnp.bfloat16)
    w3 = params["w3"].astype(jnp.bfloat16)
    b1 = params["b1"].astype(jnp.float32)
    b2 = params["b2"].astype(jnp.float32)
    b3 = params["b3"].astype(jnp.float32)

    # Batch tile: multiple of 8 (sublane rule), big enough to amortize the
    # ~0.35us per-step overhead, small enough that 2x double-buffered x tiles
    # + weights + f32 intermediates fit comfortably in v7x's 64 MiB VMEM.
    tb = _round_up(min(batch_tile, _round_up(B, 8)), 8)
    b_pad = _round_up(B, tb)
    if b_pad != B:
        x_bf = jnp.pad(x_bf, ((0, b_pad - B), (0, 0)))
    grid = (b_pad // tb,)

    # Weights/biases: single full-array block, constant block index -> stays
    # VMEM-resident across all grid steps (no re-DMA).
    resident = lambda a: pl.BlockSpec(a.shape, lambda i: (0, 0))

    cost = pl.CostEstimate(
        flops=2 * b_pad * (D * H1 + H1 * H2 + H2 * E),
        transcendentals=0,
        bytes_accessed=(x_bf.size * 2
                        + (w1.size + w2.size + w3.size) * 2
                        + (b1.size + b2.size + b3.size) * 4
                        + b_pad * E * 4),
    )

    out = pl.pallas_call(
        gating_mlp_kernel,
        out_shape=jax.ShapeDtypeStruct((b_pad, E), jnp.float32),
        grid=grid,
        in_specs=[
            pl.BlockSpec((tb, D), lambda i: (i, 0)),   # x: tiled over batch
            resident(w1), resident(b1),
            resident(w2), resident(b2),
            resident(w3), resident(b3),
        ],
        out_specs=pl.BlockSpec((tb, E), lambda i: (i, 0)),
        compiler_params=pltpu.CompilerParams(
            dimension_semantics=("parallel",),          # shard tiles on v7x's 2 TCs
            vmem_limit_bytes=32 * 1024 * 1024,          # safe on v5e/v6e/v7x
        ),
        cost_estimate=cost,
    )(x_bf, w1, b1, w2, b2, w3, b3)

    return out[:B]


def init_params(key, input_dim, num_experts, hidden_dims=(64, 32)):
    """Deterministic init mimicking nn.Linear's uniform(-1/sqrt(fan_in), ...)."""
    dims = [input_dim] + list(hidden_dims) + [num_experts]
    params = {}
    for i, (d_in, d_out) in enumerate(zip(dims[:-1], dims[1:]), start=1):
        key, kw, kb = jax.random.split(key, 3)
        bound = 1.0 / jnp.sqrt(d_in)
        params[f"w{i}"] = jax.random.uniform(
            kw, (d_in, d_out), jnp.float32, -bound, bound)
        params[f"b{i}"] = jax.random.uniform(
            kb, (1, d_out), jnp.float32, -bound, bound)
    return params


def reference_forward_bf16(x, params):
    """Plain-JAX reference that mirrors the kernel's bf16 input quantization."""
    up = lambda a: a.astype(jnp.bfloat16).astype(jnp.float32)
    h = jnp.maximum(up(x) @ up(params["w1"]) + params["b1"], 0.0)
    h = up(h)
    h = jnp.maximum(h @ up(params["w2"]) + params["b2"], 0.0)
    h = up(h)
    return h @ up(params["w3"]) + params["b3"]


def reference_forward_f32(x, params):
    """Full-precision reference of the original module forward (eval mode)."""
    h = jnp.maximum(x @ params["w1"] + params["b1"], 0.0)
    h = jnp.maximum(h @ params["w2"] + params["b2"], 0.0)
    return h @ params["w3"] + params["b3"]


if __name__ == "__main__":
    key = jax.random.PRNGKey(0)
    k_x, k_p = jax.random.split(key)

    # Small shapes consistent with the module; batch not a multiple of the
    # tile to exercise the padding path.
    batch, input_dim, num_experts = 10, 32, 4
    x = jax.random.normal(k_x, (batch, input_dim), jnp.float32)
    params = init_params(k_p, input_dim, num_experts, hidden_dims=(64, 32))

    out = gating_network_forward(x, params)
    out = jax.block_until_ready(out)

    ref_bf16 = reference_forward_bf16(x, params)
    ref_f32 = reference_forward_f32(x, params)

    assert out.shape == (batch, num_experts), out.shape
    assert jnp.all(jnp.isfinite(out)), "non-finite output"
    # Tight check vs. a reference that applies the same bf16 quantization.
    assert jnp.allclose(out, ref_bf16, atol=1e-2, rtol=1e-2), "mismatch vs bf16 ref"
    # Loose check vs. the full-f32 module semantics.
    assert jnp.allclose(out, ref_f32, atol=1e-1, rtol=1e-1), "mismatch vs f32 ref"

    print("KERNEL_OK")
</pallas_src>

<mosaic_0001>
module attributes {stable_mosaic.version = 11 : i64} {
  func.func @gating_mlp_kernel(%arg0: i32, %arg1: memref<16x32xbf16, #tpu.memory_space<vmem>>, %arg2: memref<32x64xbf16, #tpu.memory_space<vmem>>, %arg3: memref<1x64xf32, #tpu.memory_space<vmem>>, %arg4: memref<64x32xbf16, #tpu.memory_space<vmem>>, %arg5: memref<1x32xf32, #tpu.memory_space<vmem>>, %arg6: memref<32x4xbf16, #tpu.memory_space<vmem>>, %arg7: memref<1x4xf32, #tpu.memory_space<vmem>>, %arg8: memref<16x4xf32, #tpu.memory_space<vmem>>) attributes {dimension_semantics = [#tpu.dimension_semantics<parallel>], iteration_bounds = array<i64: 1>, scalar_prefetch = 0 : i64, scratch_operands = 0 : i64, tpu.core_type = #tpu.core_type<tc>, window_params = [{transform_indices = @transform_0, window_bounds = array<i64: 16, 32>}, {pipeline_mode = #tpu.pipeline_mode<synchronous>, transform_indices = @transform_1, window_bounds = array<i64: 32, 64>}, {pipeline_mode = #tpu.pipeline_mode<synchronous>, transform_indices = @transform_2, window_bounds = array<i64: 1, 64>}, {pipeline_mode = #tpu.pipeline_mode<synchronous>, transform_indices = @transform_3, window_bounds = array<i64: 64, 32>}, {pipeline_mode = #tpu.pipeline_mode<synchronous>, transform_indices = @transform_4, window_bounds = array<i64: 1, 32>}, {pipeline_mode = #tpu.pipeline_mode<synchronous>, transform_indices = @transform_5, window_bounds = array<i64: 32, 4>}, {pipeline_mode = #tpu.pipeline_mode<synchronous>, transform_indices = @transform_6, window_bounds = array<i64: 1, 4>}, {transform_indices = @transform_7, window_bounds = array<i64: 16, 4>}]} {
    %c0 = arith.constant 0 : index
    %c0_0 = arith.constant 0 : index
    %0 = vector.load %arg1[%c0, %c0_0] : memref<16x32xbf16, #tpu.memory_space<vmem>>, vector<16x32xbf16>
    %c0_1 = arith.constant 0 : index
    %c0_2 = arith.constant 0 : index
    %1 = vector.load %arg2[%c0_1, %c0_2] : memref<32x64xbf16, #tpu.memory_space<vmem>>, vector<32x64xbf16>
    %cst = arith.constant dense<0.000000e+00> : vector<16x64xf32>
    %2 = tpu.matmul %0, %1, %cst {dimension_numbers = #tpu.dot_dimension_numbers<[1], [0], [0], [1], [0, 0, 1, 1], [], []>} : vector<16x32xbf16>, vector<32x64xbf16>, vector<16x64xf32> -> vector<16x64xf32>
    %c0_3 = arith.constant 0 : index
    %c0_4 = arith.constant 0 : index
    %3 = vector.load %arg3[%c0_3, %c0_4] : memref<1x64xf32, #tpu.memory_space<vmem>>, vector<1x64xf32>
    %4 = vector.broadcast %3 : vector<1x64xf32> to vector<16x64xf32>
    %5 = arith.addf %2, %4 : vector<16x64xf32>
    %cst_5 = arith.constant 0.000000e+00 : f32
    %6 = vector.broadcast %cst_5 : f32 to vector<16x64xf32>
    %7 = arith.maximumf %5, %6 : vector<16x64xf32>
    %8 = arith.truncf %7 : vector<16x64xf32> to vector<16x64xbf16>
    %c0_6 = arith.constant 0 : index
    %c0_7 = arith.constant 0 : index
    %9 = vector.load %arg4[%c0_6, %c0_7] : memref<64x32xbf16, #tpu.memory_space<vmem>>, vector<64x32xbf16>
    %cst_8 = arith.constant dense<0.000000e+00> : vector<16x32xf32>
    %10 = tpu.matmul %8, %9, %cst_8 {dimension_numbers = #tpu.dot_dimension_numbers<[1], [0], [0], [1], [0, 0, 1, 1], [], []>} : vector<16x64xbf16>, vector<64x32xbf16>, vector<16x32xf32> -> vector<16x32xf32>
    %c0_9 = arith.constant 0 : index
    %c0_10 = arith.constant 0 : index
    %11 = vector.load %arg5[%c0_9, %c0_10] : memref<1x32xf32, #tpu.memory_space<vmem>>, vector<1x32xf32>
    %12 = vector.broadcast %11 : vector<1x32xf32> to vector<16x32xf32>
    %13 = arith.addf %10, %12 : vector<16x32xf32>
    %cst_11 = arith.constant 0.000000e+00 : f32
    %14 = vector.broadcast %cst_11 : f32 to vector<16x32xf32>
    %15 = arith.maximumf %13, %14 : vector<16x32xf32>
    %16 = arith.truncf %15 : vector<16x32xf32> to vector<16x32xbf16>
    %c0_12 = arith.constant 0 : index
    %c0_13 = arith.constant 0 : index
    %17 = vector.load %arg6[%c0_12, %c0_13] : memref<32x4xbf16, #tpu.memory_space<vmem>>, vector<32x4xbf16>
    %cst_14 = arith.constant dense<0.000000e+00> : vector<16x4xf32>
    %18 = tpu.matmul %16, %17, %cst_14 {dimension_numbers = #tpu.dot_dimension_numbers<[1], [0], [0], [1], [0, 0, 1, 1], [], []>} : vector<16x32xbf16>, vector<32x4xbf16>, vector<16x4xf32> -> vector<16x4xf32>
    %c0_15 = arith.constant 0 : index
    %c0_16 = arith.constant 0 : index
    %19 = vector.load %arg7[%c0_15, %c0_16] : memref<1x4xf32, #tpu.memory_space<vmem>>, vector<1x4xf32>
    %20 = vector.broadcast %19 : vector<1x4xf32> to vector<16x4xf32>
    %21 = arith.addf %18, %20 : vector<16x4xf32>
    %c0_17 = arith.constant 0 : index
    %c0_18 = arith.constant 0 : index
    %22 = vector.load %arg8[%c0_17, %c0_18] : memref<16x4xf32, #tpu.memory_space<vmem>>, vector<16x4xf32>
    tpu.vector_store %arg8[%c0_17, %c0_18], %21 {strides = array<i32>} : memref<16x4xf32, #tpu.memory_space<vmem>>, vector<16x4xf32>,
    return
  }
  func.func @transform_0(%arg0: i32) -> (i32, i32) {
    %c0_i32 = arith.constant 0 : i32
    %c0_i32_0 = arith.constant 0 : i32
    return %arg0, %c0_i32 : i32, i32
  }
  func.func @transform_1(%arg0: i32) -> (i32, i32) {
    %c0_i32 = arith.constant 0 : i32
    %c0_i32_0 = arith.constant 0 : i32
    %c0_i32_1 = arith.constant 0 : i32
    return %c0_i32, %c0_i32_0 : i32, i32
  }
  func.func @transform_2(%arg0: i32) -> (i32, i32) {
    %c0_i32 = arith.constant 0 : i32
    %c0_i32_0 = arith.constant 0 : i32
    %c0_i32_1 = arith.constant 0 : i32
    return %c0_i32, %c0_i32_0 : i32, i32
  }
  func.func @transform_3(%arg0: i32) -> (i32, i32) {
    %c0_i32 = arith.constant 0 : i32
    %c0_i32_0 = arith.constant 0 : i32
    %c0_i32_1 = arith.constant 0 : i32
    return %c0_i32, %c0_i32_0 : i32, i32
  }
  func.func @transform_4(%arg0: i32) -> (i32, i32) {
    %c0_i32 = arith.constant 0 : i32
    %c0_i32_0 = arith.constant 0 : i32
    %c0_i32_1 = arith.constant 0 : i32
    return %c0_i32, %c0_i32_0 : i32, i32
  }
  func.func @transform_5(%arg0: i32) -> (i32, i32) {
    %c0_i32 = arith.constant 0 : i32
    %c0_i32_0 = arith.constant 0 : i32
    %c0_i32_1 = arith.constant 0 : i32
    return %c0_i32, %c0_i32_0 : i32, i32
  }
  func.func @transform_6(%arg0: i32) -> (i32, i32) {
    %c0_i32 = arith.constant 0 : i32
    %c0_i32_0 = arith.constant 0 : i32
    %c0_i32_1 = arith.constant 0 : i32
    return %c0_i32, %c0_i32_0 : i32, i32
  }
  func.func @transform_7(%arg0: i32) -> (i32, i32) {
    %c0_i32 = arith.constant 0 : i32
    %c0_i32_0 = arith.constant 0 : i32
    return %arg0, %c0_i32 : i32, i32
  }
}

</mosaic_0001>

<llo_original>
// kernel: tpu_custom_call.1
$region0: #{tpu_custom_call.1}
  #allocation0 [shape = 'u32[]', space=smem, size = 0x4, offset = 0x4, fixed_abs, tag = 'smem constant byte address 0x4 - core index']
  #allocation1 [shape = 'u32[144,128]{1,0:T(1,128)}', space=vmem, size = 0x12000, scoped, tag = 'internal scratch']
  %s0 = inlined_call_operand.vmem [shape: bf16[16,32], index: 0, kind: input, shape index: {}]
  %s1 = inlined_call_operand.vmem [shape: bf16[32,64], index: 1, kind: input, shape index: {}]
  %s2 = inlined_call_operand.vmem [shape: f32[1,64], index: 2, kind: input, shape index: {}]
  %s3 = inlined_call_operand.vmem [shape: bf16[64,32], index: 3, kind: input, shape index: {}]
  %s4 = inlined_call_operand.vmem [shape: f32[1,32], index: 4, kind: input, shape index: {}]
  %s5 = inlined_call_operand.vmem [shape: bf16[32,4], index: 5, kind: input, shape index: {}]
  %s6 = inlined_call_operand.vmem [shape: f32[1,4], index: 6, kind: input, shape index: {}]
  %s7 = inlined_call_operand.vmem [shape: f32[16,4], index: 7, kind: output, shape index: {}]
  %s8 = sld [smem:[#allocation0]]
  $region38: #{tpu_custom_call.1} parent=0
    _
  %s10 = ssub.s32 1, %s8
  %s11 = scalar_select 0, %s10, %s8
  // Predicated region
  $region2: #{tpu_custom_call.1} parent=0 // pred_check
    _
  $region3: #{tpu_custom_call.1} parent=0 // pred_check_branch
    %13 = sbr.rel (0) target = $region5
  $region4: #{tpu_custom_call.1} parent=0 // pred_region
    _
  $region5: #{tpu_custom_call.1} parent=0 // pred_fallthru
    _
  // Predicated region
  $region6: #{tpu_custom_call.1} parent=0 // pred_check
    _
  $region7: #{tpu_custom_call.1} parent=0 // pred_check_branch
    %15 = sbr.rel (0) target = $region9
  $region8: #{tpu_custom_call.1} parent=0 // pred_region
    _
  $region9: #{tpu_custom_call.1} parent=0 // pred_fallthru
    _
  // Predicated region
  $region10: #{tpu_custom_call.1} parent=0 // pred_check
    _
  $region11: #{tpu_custom_call.1} parent=0 // pred_check_branch
    %17 = sbr.rel (0) target = $region13
  $region12: #{tpu_custom_call.1} parent=0 // pred_region
    _
  $region13: #{tpu_custom_call.1} parent=0 // pred_fallthru
    _
  // Predicated region
  $region14: #{tpu_custom_call.1} parent=0 // pred_check
    _
  $region15: #{tpu_custom_call.1} parent=0 // pred_check_branch
    %19 = sbr.rel (0) target = $region17
  $region16: #{tpu_custom_call.1} parent=0 // pred_region
    _
  $region17: #{tpu_custom_call.1} parent=0 // pred_fallthru
    _
  // Predicated region
  $region18: #{tpu_custom_call.1} parent=0 // pred_check
    _
  $region19: #{tpu_custom_call.1} parent=0 // pred_check_branch
    %21 = sbr.rel (0) target = $region21
  $region20: #{tpu_custom_call.1} parent=0 // pred_region
    _
  $region21: #{tpu_custom_call.1} parent=0 // pred_fallthru
    _
  // Predicated region
  $region22: #{tpu_custom_call.1} parent=0 // pred_check
    _
  $region23: #{tpu_custom_call.1} parent=0 // pred_check_branch
    %23 = sbr.rel (0) target = $region25
  $region24: #{tpu_custom_call.1} parent=0 // pred_region
    _
  $region25: #{tpu_custom_call.1} parent=0 // pred_fallthru
    _
  // Predicated region
  $region26: #{tpu_custom_call.1} parent=0 // pred_check
    _
  $region27: #{tpu_custom_call.1} parent=0 // pred_check_branch
    %25 = sbr.rel (0) target = $region29
  $region28: #{tpu_custom_call.1} parent=0 // pred_region
    _
  $region29: #{tpu_custom_call.1} parent=0 // pred_fallthru
    _
  %v27 = vld [vmem:[%s0] sm:$0xf]
  %v28 = vld [vmem:[%s0 + $0x4] sm:$0xf]
  %v29 = vld [vmem:[%s1] sm:$0xf]
  %v30 = vld [vmem:[%s1 + $0x4] sm:$0xf]
  %v31 = vld [vmem:[%s1 + $0x8] sm:$0xf]
  %v32 = vld [vmem:[%s1 + $0xc] sm:$0xf]
  %v33 = vld [vmem:[%s2] sm:$0x1]
  %v35 = vlaneseq
  %v36 = vshrl.u32 %v35, 7
  %v37 = vsub.s32 0, %v36
  %v38 = vrot.slane %v33, %v37
  %v42 = vunpack.c.l.b16 %v27
  %v43 = vunpack.c.l.b16 %v28
  %v44 = vpack.c.b16 %v43, %v42
  %v49 = vunpack.c.l.b16 %v29
  %v50 = vunpack.c.l.b16 %v30
  %v51 = vunpack.c.l.b16 %v31
  %v52 = vunpack.c.l.b16 %v32
  %v53 = vpack.c.b16 %v50, %v49
  %v54 = vpack.c.b16 %v52, %v51
  %vm57 = vcmask 261120
  %v59 = vsel %vm57, %v44, 0
  %61 = vmatprep.subr.bf16.mxu0 0
  %62 = vmatpush1.bf16.msra.mxu0 %v53
  %63 = vmatprep.subr.bf16.mxu0 0
  %64 = vmatpush1.bf16.msra.mxu0 %v54
  %65 = vmatprep.subr.bf16.mxu0 0
  %66 = vmatpush1.bf16.msra.mxu0 0
  %67 = vmatprep.subr.bf16.mxu0 0
  %68 = vmatpush1.bf16.msra.mxu0 0
  %69 = vmatprep.subr.bf16.mxu0 0
  %70 = vmatpush1.bf16.msra.mxu0 0
  %71 = vmatprep.subr.bf16.mxu0 0
  %72 = vmatpush1.bf16.msra.mxu0 0
  %73 = vmatprep.subr.bf16.mxu0 0
  %74 = vmatpush1.bf16.msra.mxu0 0
  %75 = vmatprep.subr.bf16.mxu0 0
  %76 = vmatpush1.bf16.msra.mxu0 0
  %77 = vmatprep.subr.bf16.mxu0 0
  %78 = vmatpush1.bf16.msra.mxu0 0
  %79 = vmatprep.subr.bf16.mxu0 0
  %80 = vmatpush1.bf16.msra.mxu0 0
  %81 = vmatprep.subr.bf16.mxu0 0
  %82 = vmatpush1.bf16.msra.mxu0 0
  %83 = vmatprep.subr.bf16.mxu0 0
  %84 = vmatpush1.bf16.msra.mxu0 0
  %85 = vmatprep.subr.bf16.mxu0 0
  %86 = vmatpush1.bf16.msra.mxu0 0
  %87 = vmatprep.subr.bf16.mxu0 0
  %88 = vmatpush1.bf16.msra.mxu0 0
  %89 = vmatprep.subr.bf16.mxu0 0
  %90 = vmatpush1.bf16.msra.mxu0 0
  %91 = vmatprep.subr.bf16.mxu0 0
  %92 = vmatpush1.bf16.msra.mxu0 0
  %93 = vmatprep.mubr.bf16.mxu0 0
  %94 = vmatmul.mubr.bf16.gmra.mrb[0].mxu0 %v59
  %v95 = vpop.f32.mrb[0].mxu0
  %v96 = vadd.f32 %v38, %v95
  %v97 = vpop.f32.mrb[0].mxu0
  %v98 = vpop.f32.mrb[0].mxu0
  %v99 = vadd.f32 %v38, %v98
  %v100 = vpop.f32.mrb[0].mxu0
  %101 = vdwg.mxu0
  %v102 = vmax.f32 %v96, 0.0
  %v103 = vmax.f32 %v99, 0.0
  %v104 = vpack.c.bf16 %v103, %v102
  %v105 = vld [vmem:[%s3] sm:$0xf]
  %v106 = vld [vmem:[%s3 + $0x4] sm:$0xf]
  %v107 = vld [vmem:[%s3 + $0x8] sm:$0xf]
  %v108 = vld [vmem:[%s3 + $0xc] sm:$0xf]
  %v109 = vld [vmem:[%s3 + $0x10] sm:$0xf]
  %v110 = vld [vmem:[%s3 + $0x14] sm:$0xf]
  %v111 = vld [vmem:[%s3 + $0x18] sm:$0xf]
  %v112 = vld [vmem:[%s3 + $0x1c] sm:$0xf]
  %v113 = vld [vmem:[%s4] sm:$0x1]
  %v115 = vlaneseq
  %v116 = vshrl.u32 %v115, 7
  %v117 = vsub.s32 0, %v116
  %v118 = vrot.slane %v113, %v117
  %v128 = vunpack.c.l.b16 %v105
  %v129 = vunpack.c.l.b16 %v106
  %v130 = vunpack.c.l.b16 %v107
  %v131 = vunpack.c.l.b16 %v108
  %v132 = vunpack.c.l.b16 %v109
  %v133 = vunpack.c.l.b16 %v110
  %v134 = vunpack.c.l.b16 %v111
  %v135 = vunpack.c.l.b16 %v112
  %v136 = vpack.c.b16 %v129, %v128
  %v137 = vpack.c.b16 %v131, %v130
  %v138 = vpack.c.b16 %v133, %v132
  %v139 = vpack.c.b16 %v135, %v134
  %vm144 = vcmask 523264
  %v146 = vsel %vm144, %v104, 0
  %148 = vmatprep.subr.bf16.mxu0 0
  %149 = vmatpush1.bf16.msra.mxu0 %v136
  %150 = vmatprep.subr.bf16.mxu0 0
  %151 = vmatpush1.bf16.msra.mxu0 %v137
  %152 = vmatprep.subr.bf16.mxu0 0
  %153 = vmatpush1.bf16.msra.mxu0 %v138
  %154 = vmatprep.subr.bf16.mxu0 0
  %155 = vmatpush1.bf16.msra.mxu0 %v139
  %156 = vmatprep.subr.bf16.mxu0 0
  %157 = vmatpush1.bf16.msra.mxu0 0
  %158 = vmatprep.subr.bf16.mxu0 0
  %159 = vmatpush1.bf16.msra.mxu0 0
  %160 = vmatprep.subr.bf16.mxu0 0
  %161 = vmatpush1.bf16.msra.mxu0 0
  %162 = vmatprep.subr.bf16.mxu0 0
  %163 = vmatpush1.bf16.msra.mxu0 0
  %164 = vmatprep.subr.bf16.mxu0 0
  %165 = vmatpush1.bf16.msra.mxu0 0
  %166 = vmatprep.subr.bf16.mxu0 0
  %167 = vmatpush1.bf16.msra.mxu0 0
  %168 = vmatprep.subr.bf16.mxu0 0
  %169 = vmatpush1.bf16.msra.mxu0 0
  %170 = vmatprep.subr.bf16.mxu0 0
  %171 = vmatpush1.bf16.msra.mxu0 0
  %172 = vmatprep.subr.bf16.mxu0 0
  %173 = vmatpush1.bf16.msra.mxu0 0
  %174 = vmatprep.subr.bf16.mxu0 0
  %175 = vmatpush1.bf16.msra.mxu0 0
  %176 = vmatprep.subr.bf16.mxu0 0
  %177 = vmatpush1.bf16.msra.mxu0 0
  %178 = vmatprep.subr.bf16.mxu0 0
  %179 = vmatpush1.bf16.msra.mxu0 0
  %180 = vmatprep.mubr.bf16.mxu0 0
  %181 = vmatmul.mubr.bf16.gmra.mrb[0].mxu0 %v146
  %v182 = vpop.f32.mrb[0].mxu0
  %v183 = vadd.f32 %v118, %v182
  %v184 = vpop.f32.mrb[0].mxu0
  %v185 = vpop.f32.mrb[0].mxu0
  %v186 = vadd.f32 %v118, %v185
  %v187 = vpop.f32.mrb[0].mxu0
  %188 = vdwg.mxu0
  %v189 = vmax.f32 %v183, 0.0
  %v190 = vmax.f32 %v186, 0.0
  %v191 = vpack.c.bf16 %v190, %v189
  %v192 = vld [vmem:[%s5] sm:$0xf]
  %v193 = vld [vmem:[%s5 + $0x4] sm:$0xf]
  %v194 = vld [vmem:[%s5 + $0x8] sm:$0xf]
  %v195 = vld [vmem:[%s5 + $0xc] sm:$0xf]
  %v196 = vld [vmem:[%s6] sm:$0x1]
  %v198 = vlaneseq
  %v199 = vshrl.u32 %v198, 7
  %v200 = vsub.s32 0, %v199
  %v201 = vrot.slane %v196, %v200
  %v207 = vunpack.c.l.b16 %v192
  %v208 = vunpack.c.l.b16 %v193
  %v209 = vunpack.c.l.b16 %v194
  %v210 = vunpack.c.l.b16 %v195
  %v211 = vpack.c.b16 %v208, %v207
  %v212 = vpack.c.b16 %v210, %v209
  %v216 = vsel %vm57, %v191, 0
  %218 = vmatprep.subr.bf16.mxu0 0
  %219 = vmatpush1.bf16.msra.mxu0 %v211
  %220 = vmatprep.subr.bf16.mxu0 0
  %221 = vmatpush1.bf16.msra.mxu0 %v212
  %222 = vmatprep.subr.bf16.mxu0 0
  %223 = vmatpush1.bf16.msra.mxu0 0
  %224 = vmatprep.subr.bf16.mxu0 0
  %225 = vmatpush1.bf16.msra.mxu0 0
  %226 = vmatprep.subr.bf16.mxu0 0
  %227 = vmatpush1.bf16.msra.mxu0 0
  %228 = vmatprep.subr.bf16.mxu0 0
  %229 = vmatpush1.bf16.msra.mxu0 0
  %230 = vmatprep.subr.bf16.mxu0 0
  %231 = vmatpush1.bf16.msra.mxu0 0
  %232 = vmatprep.subr.bf16.mxu0 0
  %233 = vmatpush1.bf16.msra.mxu0 0
  %234 = vmatprep.subr.bf16.mxu0 0
  %235 = vmatpush1.bf16.msra.mxu0 0
  %236 = vmatprep.subr.bf16.mxu0 0
  %237 = vmatpush1.bf16.msra.mxu0 0
  %238 = vmatprep.subr.bf16.mxu0 0
  %239 = vmatpush1.bf16.msra.mxu0 0
  %240 = vmatprep.subr.bf16.mxu0 0
  %241 = vmatpush1.bf16.msra.mxu0 0
  %242 = vmatprep.subr.bf16.mxu0 0
  %243 = vmatpush1.bf16.msra.mxu0 0
  %244 = vmatprep.subr.bf16.mxu0 0
  %245 = vmatpush1.bf16.msra.mxu0 0
  %246 = vmatprep.subr.bf16.mxu0 0
  %247 = vmatpush1.bf16.msra.mxu0 0
  %248 = vmatprep.subr.bf16.mxu0 0
  %249 = vmatpush1.bf16.msra.mxu0 0
  %250 = vmatprep.mubr.bf16.mxu0 0
  %251 = vmatmul.mubr.bf16.gmra.mrb[0].mxu0 %v216
  %v252 = vpop.f32.mrb[0].mxu0
  %v253 = vadd.f32 %v201, %v252
  %v254 = vpop.f32.mrb[0].mxu0
  %v255 = vpop.f32.mrb[0].mxu0
  %v256 = vadd.f32 %v201, %v255
  %v257 = vpop.f32.mrb[0].mxu0
  %258 = vdwg.mxu0
  %vm259 = vcmask 31744
  %260 = vst.msk [vmem:[%s7] sm:$0xff] %vm259, %v253
  %261 = vst.msk [vmem:[%s7 + $0x8] sm:$0xff] %vm259, %v256
  // Predicated region
  $region30: #{tpu_custom_call.1} parent=0 // pred_check
    _
  $region31: #{tpu_custom_call.1} parent=0 // pred_check_branch
    %263 = sbr.rel (0) target = $region33
  $region32: #{tpu_custom_call.1} parent=0 // pred_region
    _
  $region33: #{tpu_custom_call.1} parent=0 // pred_fallthru
    _
  // Predicated region
  $region34: #{tpu_custom_call.1} parent=0 // pred_check
    _
  $region35: #{tpu_custom_call.1} parent=0 // pred_check_branch
    %265 = sbr.rel (0) target = $region37
  $region36: #{tpu_custom_call.1} parent=0 // pred_region
    _
  $region37: #{tpu_custom_call.1} parent=0 // pred_fallthru
    _

</llo_original>
